<compile_context>
chip_gen: v7x
topology: tpu7x:2x2x1
jax: 0.10.0
libtpu: 0.0.40
codegen_flags: <defaults>
</compile_context>

<pallas_src>
import numpy as np
import jax
import jax.numpy as jnp
from jax import lax
from jax.experimental import pallas as pl
from jax.experimental.pallas import tpu as pltpu


def _bilinear_matrix(in_size, out_size):
    """F.upsample(mode='bilinear', align_corners=False) as an (out, in) matrix."""
    A = np.zeros((out_size, in_size), dtype=np.float32)
    scale = in_size / out_size
    for d in range(out_size):
        src = (d + 0.5) * scale - 0.5
        if src < 0.0:
            src = 0.0
        i0 = int(np.floor(src))
        i0 = min(i0, in_size - 1)
        lam = src - i0
        i1 = i0 + 1 if i0 < in_size - 1 else i0
        A[d, i0] += 1.0 - lam
        A[d, i1] += lam
    return A


def _conv_kernel(alpha_ref, w_ref, p_ref, o_ref):
    """PReLU + Conv2d as a transposed im2col GEMM tile: (O, KKC) @ (KKC, cols)."""
    alpha = alpha_ref[0]
    p = p_ref[0].astype(jnp.float32)            # (KKC, cols) bf16 -> f32
    p = jnp.where(p > 0, p, alpha * p)          # PReLU once, in f32 (v5e-safe); PReLU(0)=0
    o_ref[0] = jnp.dot(w_ref[...], p.astype(jnp.bfloat16),
                       preferred_element_type=jnp.float32).astype(jnp.bfloat16)


def _upsample_kernel(bias_ref, c_ref, awt_ref, ah_ref, o_ref, upw_ref):
    """Separable bilinear upsample (+ bias), output directly in NCHW layout.

    c_ref   : (1, O*Ho, Wo)  bf16  conv output slab of this image (resident across t)
    awt_ref : (Wo, W2)       bf16  A_w^T
    ah_ref  : (tile_h2, Ho)  bf16  row tile of A_h
    o_ref   : (1, O, tile_h2, W2) f32
    upw_ref : (O*Ho, W2)     f32   VMEM scratch, computed once per image at t == 0
    """
    O_ = o_ref.shape[1]
    Ho = upw_ref.shape[0] // O_

    # W-upsample for the whole image, once per image (t == 0), reused across H2 tiles.
    @pl.when(pl.program_id(1) == 0)
    def _():
        upw_ref[...] = jnp.dot(c_ref[0], awt_ref[...],
                               preferred_element_type=jnp.float32)

    ah = ah_ref[...]                            # (tile_h2, Ho) bf16

    def body(o, carry):
        start = pl.multiple_of(o * Ho, Ho)
        rows = upw_ref[pl.ds(start, Ho), :]     # (Ho, W2) f32
        blk = jnp.dot(ah, rows.astype(jnp.bfloat16),
                      preferred_element_type=jnp.float32)   # (tile_h2, W2) f32
        # Interp rows sum to 1 -> conv bias commutes with the upsample.
        o_ref[0, o] = blk + bias_ref[o]
        return carry

    lax.fori_loop(0, O_, body, 0)


def deconv_block_forward(x, conv_w, conv_b, alpha, kernel_size=4, stride=2, padding=1):
    """DeconvBlock.forward (batch_norm=False, dropout=False).  x is NCHW; output is NCHW."""
    N, C, H, W = x.shape
    O = conv_w.shape[0]
    K = kernel_size
    P = padding
    Ho = (H + 2 * P - K) // stride + 1
    Wo = (W + 2 * P - K) // stride + 1
    H2 = W2 = 2 * W                    # module quirk: x.shape[-1]*2 for BOTH output dims
    KKC = K * K * C
    HoWo = Ho * Wo

    vmem_lim = 48 * 1024 * 1024        # explicit scoped-VMEM budget, valid v5e/v6e/v7x

    # ---- glue (stays NCHW): zero-pad spatial, transposed im2col in bf16 ----
    x_pad = jnp.pad(x, ((0, 0), (0, 0), (P, P), (P, P)))
    taps = [x_pad[:, :, kh:kh + stride * Ho:stride, kw:kw + stride * Wo:stride]
            for kh in range(K) for kw in range(K)]                    # each (N, C, Ho, Wo)
    patches_t = jnp.stack(taps, axis=1).reshape(N, KKC, HoWo).astype(jnp.bfloat16)

    w_t = jnp.transpose(conv_w, (0, 2, 3, 1)).reshape(O, KKC).astype(jnp.bfloat16)
    alpha_arr = jnp.reshape(jnp.asarray(alpha, jnp.float32), (1,))

    # Optional lane tiling of the conv GEMM output columns (kept full when small).
    if HoWo > 256 and HoWo % 256 == 0:
        col_t = 256
    else:
        col_t = HoWo
    n_col = HoWo // col_t

    # ---- stage 1: PReLU + conv as W(O,KKC) @ patchesT(KKC,HoWo), bf16 in / f32 acc ----
    conv_out = pl.pallas_call(
        _conv_kernel,
        out_shape=jax.ShapeDtypeStruct((N, O, HoWo), jnp.bfloat16),
        grid_spec=pltpu.PrefetchScalarGridSpec(
            num_scalar_prefetch=0,
            grid=(N, n_col),
            in_specs=[
                pl.BlockSpec(memory_space=pltpu.MemorySpace.SMEM),        # PReLU alpha
                pl.BlockSpec((O, KKC), lambda n, j: (0, 0)),              # conv weight (resident)
                pl.BlockSpec((1, KKC, col_t), lambda n, j: (n, 0, j)),    # im2col columns
            ],
            out_specs=pl.BlockSpec((1, O, col_t), lambda n, j: (n, 0, j)),
        ),
        compiler_params=pltpu.CompilerParams(
            dimension_semantics=("parallel", "parallel"),
            vmem_limit_bytes=vmem_lim),
    )(alpha_arr, w_t, patches_t)

    # ---- glue: (N, O, Ho*Wo) -> (N, O*Ho, Wo) is a FREE row-major reshape ----
    conv_r = conv_out.reshape(N, O * Ho, Wo)

    # ---- static upsample operands (interp entries are exact multiples of 1/8 -> bf16-exact) ----
    A_h = jnp.asarray(_bilinear_matrix(Ho, H2)).astype(jnp.bfloat16)      # (H2, Ho)
    A_wT = jnp.asarray(_bilinear_matrix(Wo, W2).T).astype(jnp.bfloat16)   # (Wo, W2)
    bias = conv_b.astype(jnp.float32)                                     # (O,) in SMEM

    tile_h2 = 128 if (H2 % 128 == 0) else H2
    n_t = H2 // tile_h2

    # ---- stage 2: separable bilinear upsample + bias, NCHW output, tiled over H2 ----
    out = pl.pallas_call(
        _upsample_kernel,
        out_shape=jax.ShapeDtypeStruct((N, O, H2, W2), jnp.float32),
        grid_spec=pltpu.PrefetchScalarGridSpec(
            num_scalar_prefetch=0,
            grid=(N, n_t),
            in_specs=[
                pl.BlockSpec(memory_space=pltpu.MemorySpace.SMEM),        # conv bias (O,)
                pl.BlockSpec((1, O * Ho, Wo), lambda n, t: (n, 0, 0)),    # conv slab (resident over t)
                pl.BlockSpec((Wo, W2), lambda n, t: (0, 0)),              # A_w^T (resident)
                pl.BlockSpec((tile_h2, Ho), lambda n, t: (t, 0)),         # A_h row tile
            ],
            out_specs=pl.BlockSpec((1, O, tile_h2, W2), lambda n, t: (n, 0, t, 0)),
            scratch_shapes=[pltpu.VMEM((O * Ho, W2), jnp.float32)],
        ),
        compiler_params=pltpu.CompilerParams(
            dimension_semantics=("parallel", "arbitrary"),
            vmem_limit_bytes=vmem_lim),
    )(bias, conv_r, A_wT, A_h)

    return out                                                            # already NCHW


def reference_forward(x, conv_w, conv_b, alpha):
    """Plain-JAX f32 reference of the same forward pass (for a sanity check)."""
    N, C, H, W = x.shape
    Ho, Wo = H // 2, W // 2
    H2 = W2 = 2 * W
    y = jnp.where(x > 0, x, alpha * x)
    y_nhwc = jnp.transpose(y, (0, 2, 3, 1))
    w_hwio = jnp.transpose(conv_w, (2, 3, 1, 0))
    conv = jax.lax.conv_general_dilated(
        y_nhwc, w_hwio, window_strides=(2, 2), padding=((1, 1), (1, 1)),
        dimension_numbers=('NHWC', 'HWIO', 'NHWC'))
    conv = conv + conv_b
    A_h = jnp.asarray(_bilinear_matrix(Ho, H2))
    A_w = jnp.asarray(_bilinear_matrix(Wo, W2))
    up = jnp.einsum('Hh,nhwo->nHwo', A_h, conv)
    up = jnp.einsum('Ww,nHwo->nHWo', A_w, up)
    return jnp.transpose(up, (0, 3, 1, 2))


if __name__ == "__main__":
    key = jax.random.PRNGKey(0)
    k_x, k_w, k_b = jax.random.split(key, 3)

    N, C_in, H, W = 2, 4, 16, 16
    C_out = 8
    K = 4

    x = jax.random.normal(k_x, (N, C_in, H, W), dtype=jnp.float32)

    # Deterministic parameter init (PyTorch Conv2d default: U(-1/sqrt(fan_in), 1/sqrt(fan_in)))
    fan_in = C_in * K * K
    bound = 1.0 / float(np.sqrt(fan_in))
    conv_w = jax.random.uniform(k_w, (C_out, C_in, K, K), jnp.float32, -bound, bound)
    conv_b = jax.random.uniform(k_b, (C_out,), jnp.float32, -bound, bound)
    alpha = jnp.array(0.25, jnp.float32)          # PReLU default init

    fwd = jax.jit(deconv_block_forward,
                  static_argnames=("kernel_size", "stride", "padding"))
    out = fwd(x, conv_w, conv_b, alpha)
    out = jax.block_until_ready(out)

    assert out.shape == (N, C_out, 2 * W, 2 * W), out.shape
    ref = reference_forward(x, conv_w, conv_b, alpha)
    # bf16 matmul operands / bf16 intermediates with f32 accumulation -> ~1e-3..1e-2 error.
    np.testing.assert_allclose(np.asarray(out), np.asarray(ref), rtol=1e-2, atol=1e-2)

    print("KERNEL_OK")
</pallas_src>

<mosaic_0001>
module attributes {stable_mosaic.version = 11 : i64} {
  func.func @_conv_kernel(%arg0: i32, %arg1: i32, %arg2: memref<1xf32, #tpu.memory_space<smem>>, %arg3: memref<8x64xbf16, #tpu.memory_space<vmem>>, %arg4: memref<1x64x64xbf16, #tpu.memory_space<vmem>>, %arg5: memref<1x8x64xbf16, #tpu.memory_space<vmem>>) attributes {dimension_semantics = [#tpu.dimension_semantics<parallel>, #tpu.dimension_semantics<parallel>], iteration_bounds = array<i64: 2, 1>, scalar_prefetch = 0 : i64, scratch_operands = 0 : i64, tpu.core_type = #tpu.core_type<tc>, window_params = [{transform_indices = @transform_0, window_bounds = array<i64: 1>}, {pipeline_mode = #tpu.pipeline_mode<synchronous>, transform_indices = @transform_1, window_bounds = array<i64: 8, 64>}, {transform_indices = @transform_2, window_bounds = array<i64: 1, 64, 64>}, {transform_indices = @transform_3, window_bounds = array<i64: 1, 8, 64>}]} {
    %c0 = arith.constant 0 : index
    %0 = memref.load %arg2[%c0] : memref<1xf32, #tpu.memory_space<smem>>
    %c0_0 = arith.constant 0 : index
    %c0_1 = arith.constant 0 : index
    %c0_2 = arith.constant 0 : index
    %1 = vector.load %arg4[%c0_0, %c0_1, %c0_2] : memref<1x64x64xbf16, #tpu.memory_space<vmem>>, vector<1x64x64xbf16>
    %2 = vector.shape_cast %1 : vector<1x64x64xbf16> to vector<64x64xbf16>
    %3 = arith.extf %2 : vector<64x64xbf16> to vector<64x64xf32>
    %cst = arith.constant 0.000000e+00 : f32
    %4 = vector.broadcast %cst : f32 to vector<64x64xf32>
    %5 = arith.cmpf ogt, %3, %4 : vector<64x64xf32>
    %6 = vector.broadcast %0 : f32 to vector<64x64xf32>
    %7 = arith.mulf %6, %3 : vector<64x64xf32>
    %8 = arith.select %5, %3, %7 : vector<64x64xi1>, vector<64x64xf32>
    %c0_3 = arith.constant 0 : index
    %c0_4 = arith.constant 0 : index
    %9 = vector.load %arg3[%c0_3, %c0_4] : memref<8x64xbf16, #tpu.memory_space<vmem>>, vector<8x64xbf16>
    %10 = arith.truncf %8 : vector<64x64xf32> to vector<64x64xbf16>
    %cst_5 = arith.constant dense<0.000000e+00> : vector<8x64xf32>
    %11 = tpu.matmul %9, %10, %cst_5 {dimension_numbers = #tpu.dot_dimension_numbers<[1], [0], [0], [1], [0, 0, 1, 1], [], []>} : vector<8x64xbf16>, vector<64x64xbf16>, vector<8x64xf32> -> vector<8x64xf32>
    %12 = arith.truncf %11 : vector<8x64xf32> to vector<8x64xbf16>
    %c0_6 = arith.constant 0 : index
    %c0_7 = arith.constant 0 : index
    %c0_8 = arith.constant 0 : index
    %13 = vector.load %arg5[%c0_6, %c0_7, %c0_8] : memref<1x8x64xbf16, #tpu.memory_space<vmem>>, vector<1x8x64xbf16>
    %14 = vector.shape_cast %13 : vector<1x8x64xbf16> to vector<8x64xbf16>
    %15 = vector.shape_cast %12 : vector<8x64xbf16> to vector<1x8x64xbf16>
    tpu.vector_store %arg5[%c0_6, %c0_7, %c0_8], %15 {strides = array<i32>} : memref<1x8x64xbf16, #tpu.memory_space<vmem>>, vector<1x8x64xbf16>,
    return
  }
  func.func @transform_0(%arg0: i32, %arg1: i32) -> i32 {
    %c0_i32 = arith.constant 0 : i32
    %c0_i32_0 = arith.constant 0 : i32
    return %c0_i32 : i32
  }
  func.func @transform_1(%arg0: i32, %arg1: i32) -> (i32, i32) {
    %c0_i32 = arith.constant 0 : i32
    %c0_i32_0 = arith.constant 0 : i32
    %c0_i32_1 = arith.constant 0 : i32
    return %c0_i32, %c0_i32_0 : i32, i32
  }
  func.func @transform_2(%arg0: i32, %arg1: i32) -> (i32, i32, i32) {
    %c0_i32 = arith.constant 0 : i32
    %c0_i32_0 = arith.constant 0 : i32
    return %arg0, %c0_i32, %arg1 : i32, i32, i32
  }
  func.func @transform_3(%arg0: i32, %arg1: i32) -> (i32, i32, i32) {
    %c0_i32 = arith.constant 0 : i32
    %c0_i32_0 = arith.constant 0 : i32
    return %arg0, %c0_i32, %arg1 : i32, i32, i32
  }
}

module attributes {stable_mosaic.version = 11 : i64} {
  func.func @_upsample_kernel(%arg0: i32, %arg1: i32, %arg2: memref<8xf32, #tpu.memory_space<smem>>, %arg3: memref<1x64x8xbf16, #tpu.memory_space<vmem>>, %arg4: memref<8x32xbf16, #tpu.memory_space<vmem>>, %arg5: memref<32x8xbf16, #tpu.memory_space<vmem>>, %arg6: memref<1x8x32x32xf32, #tpu.memory_space<vmem>>, %arg7: memref<64x32xf32, #tpu.memory_space<vmem>>) attributes {dimension_semantics = [#tpu.dimension_semantics<parallel>, #tpu.dimension_semantics<arbitrary>], iteration_bounds = array<i64: 2, 1>, scalar_prefetch = 0 : i64, scratch_operands = 1 : i64, tpu.core_type = #tpu.core_type<tc>, window_params = [{transform_indices = @transform_0, window_bounds = array<i64: 8>}, {transform_indices = @transform_1, window_bounds = array<i64: 1, 64, 8>}, {pipeline_mode = #tpu.pipeline_mode<synchronous>, transform_indices = @transform_2, window_bounds = array<i64: 8, 32>}, {transform_indices = @transform_3, window_bounds = array<i64: 32, 8>}, {transform_indices = @transform_4, window_bounds = array<i64: 1, 8, 32, 32>}]} {
    %c0_i32 = arith.constant 0 : i32
    %0 = arith.cmpi eq, %arg1, %c0_i32 : i32
    %1 = arith.extui %0 : i1 to i32
    %c0_i32_0 = arith.constant 0 : i32
    %2 = arith.cmpi ne, %1, %c0_i32_0 : i32
    scf.if %2 {
      %c0_4 = arith.constant 0 : index
      %c0_5 = arith.constant 0 : index
      %c0_6 = arith.constant 0 : index
      %5 = vector.load %arg3[%c0_4, %c0_5, %c0_6] : memref<1x64x8xbf16, #tpu.memory_space<vmem>>, vector<1x64x8xbf16>
      %6 = vector.shape_cast %5 : vector<1x64x8xbf16> to vector<64x8xbf16>
      %c0_7 = arith.constant 0 : index
      %c0_8 = arith.constant 0 : index
      %7 = vector.load %arg4[%c0_7, %c0_8] : memref<8x32xbf16, #tpu.memory_space<vmem>>, vector<8x32xbf16>
      %cst = arith.constant dense<0.000000e+00> : vector<64x32xf32>
      %8 = tpu.matmul %6, %7, %cst {dimension_numbers = #tpu.dot_dimension_numbers<[1], [0], [0], [1], [0, 0, 1, 1], [], []>} : vector<64x8xbf16>, vector<8x32xbf16>, vector<64x32xf32> -> vector<64x32xf32>
      %c0_9 = arith.constant 0 : index
      %c0_10 = arith.constant 0 : index
      %9 = vector.load %arg7[%c0_9, %c0_10] : memref<64x32xf32, #tpu.memory_space<vmem>>, vector<64x32xf32>
      tpu.vector_store %arg7[%c0_9, %c0_10], %8 {strides = array<i32>} : memref<64x32xf32, #tpu.memory_space<vmem>>, vector<64x32xf32>,
    } else {
    }
    %c0 = arith.constant 0 : index
    %c0_1 = arith.constant 0 : index
    %3 = vector.load %arg5[%c0, %c0_1] : memref<32x8xbf16, #tpu.memory_space<vmem>>, vector<32x8xbf16>
    %c0_i32_2 = arith.constant 0 : i32
    %c8_i32 = arith.constant 8 : i32
    %4 = arith.addi %c0_i32_2, %c8_i32 : i32
    %c1_i32 = arith.constant 1 : i32
    scf.for %arg8 = %c0_i32_2 to %4 step %c1_i32  : i32 {
      %c8_i32_4 = arith.constant 8 : i32
      %5 = arith.muli %arg8, %c8_i32_4 : i32
      %6 = tpu.assume_multiple %5, 8 : i32
      %7 = arith.index_cast %6 : i32 to index
      %c0_5 = arith.constant 0 : index
      %8 = vector.load %arg7[%7, %c0_5] : memref<64x32xf32, #tpu.memory_space<vmem>>, vector<8x32xf32>
      %9 = arith.truncf %8 : vector<8x32xf32> to vector<8x32xbf16>
      %cst = arith.constant dense<0.000000e+00> : vector<32x32xf32>
      %10 = tpu.matmul %3, %9, %cst {dimension_numbers = #tpu.dot_dimension_numbers<[1], [0], [0], [1], [0, 0, 1, 1], [], []>} : vector<32x8xbf16>, vector<8x32xbf16>, vector<32x32xf32> -> vector<32x32xf32>
      %11 = arith.index_cast %arg8 : i32 to index
      %12 = memref.load %arg2[%11] : memref<8xf32, #tpu.memory_space<smem>>
      %13 = vector.broadcast %12 : f32 to vector<32x32xf32>
      %14 = arith.addf %10, %13 : vector<32x32xf32>
      %c0_6 = arith.constant 0 : index
      %15 = arith.index_cast %arg8 : i32 to index
      %c0_7 = arith.constant 0 : index
      %c0_8 = arith.constant 0 : index
      %16 = vector.load %arg6[%c0_6, %15, %c0_7, %c0_8] : memref<1x8x32x32xf32, #tpu.memory_space<vmem>>, vector<1x1x32x32xf32>
      %17 = vector.shape_cast %16 : vector<1x1x32x32xf32> to vector<32x32xf32>
      %18 = vector.shape_cast %14 : vector<32x32xf32> to vector<1x1x32x32xf32>
      tpu.vector_store %arg6[%c0_6, %15, %c0_7, %c0_8], %18 {strides = array<i32>} : memref<1x8x32x32xf32, #tpu.memory_space<vmem>>, vector<1x1x32x32xf32>,
    }
    %c8_i32_3 = arith.constant 8 : i32
    return
  }
  func.func @transform_0(%arg0: i32, %arg1: i32) -> i32 {
    %c0_i32 = arith.constant 0 : i32
    %c0_i32_0 = arith.constant 0 : i32
    return %c0_i32 : i32
  }
  func.func @transform_1(%arg0: i32, %arg1: i32) -> (i32, i32, i32) {
    %c0_i32 = arith.constant 0 : i32
    %c0_i32_0 = arith.constant 0 : i32
    %c0_i32_1 = arith.constant 0 : i32
    return %arg0, %c0_i32, %c0_i32_0 : i32, i32, i32
  }
  func.func @transform_2(%arg0: i32, %arg1: i32) -> (i32, i32) {
    %c0_i32 = arith.constant 0 : i32
    %c0_i32_0 = arith.constant 0 : i32
    %c0_i32_1 = arith.constant 0 : i32
    return %c0_i32, %c0_i32_0 : i32, i32
  }
  func.func @transform_3(%arg0: i32, %arg1: i32) -> (i32, i32) {
    %c0_i32 = arith.constant 0 : i32
    %c0_i32_0 = arith.constant 0 : i32
    return %arg1, %c0_i32 : i32, i32
  }
  func.func @transform_4(%arg0: i32, %arg1: i32) -> (i32, i32, i32, i32) {
    %c0_i32 = arith.constant 0 : i32
    %c0_i32_0 = arith.constant 0 : i32
    %c0_i32_1 = arith.constant 0 : i32
    return %arg0, %c0_i32, %arg1, %c0_i32_0 : i32, i32, i32, i32
  }
}

</mosaic_0001>

<llo_original>
// kernel: deconv_block_forward.2
$region0: #{deconv_block_forward.2}
  #allocation0 [shape = 'u32[]', space=smem, size = 0x4, offset = 0x4, fixed_abs, tag = 'smem constant byte address 0x4 - core index']
  #allocation1 [shape = 'u32[144,128]{1,0:T(1,128)}', space=vmem, size = 0x12000, scoped, tag = 'internal scratch']
  #allocation2 [shape = 'f32[1]{0:T(128)S(6)}', space=smem, size = 0x200, scoped, tag = 'scoped memory for deconv_block_forward.2']
  %s0 = inlined_call_operand.<no memory space> [shape: f32[1], index: 0, kind: input, shape index: {}]
  %s1 = inlined_call_operand.vmem [shape: bf16[8,64], index: 1, kind: input, shape index: {}]
  %s2 = inlined_call_operand.vmem [shape: bf16[2,64,64], index: 2, kind: input, shape index: {}]
  %s3 = inlined_call_operand.vmem [shape: bf16[2,8,64], index: 3, kind: output, shape index: {}]
  %s4 = sld [smem:[#allocation0]]
  $region45: #{deconv_block_forward.2} parent=0
    _
  %s6 = ssub.s32 1, %s4
  %s7 = scalar_select 0, %s6, %s4
  %8 = sst [smem:[#allocation2]] %s0
  loop: start=0, step=1, limit=4
  $region2: #{deconv_block_forward.2} parent=0 // loop_pre_header
    _
  $region3: #{deconv_block_forward.2} parent=0 // loop_header
    %s10 = sphi 0, %s14
    %p11 = scmp.ge.s32.totalorder %s10, 4
    %s17 = sphi 0, %s29
    %s18 = sphi 0, %s25
    %s19 = sphi 0, %s17
    %s20 = sphi 0, %s18
    %s21 = sphi 0, %s19
    %s22 = sphi 0, %s20
    %s30 = sphi 0, %s30
    %s32 = sphi 0, %s30
    %s33 = sphi 0, %s32
    %s47 = sphi 0, %s33
    %s51 = sphi 0, %s51
    %s53 = sphi 0, %s51
    %s54 = sphi 0, %s53
    %s68 = sphi 0, %s54
    %s76 = sphi 0, %s78
    %s79 = sphi 0, %s76
    %s80 = sphi 0, %s79
    %s96 = sphi 0, %s80
    %s104 = sphi 0, %s106
    %s107 = sphi 0, %s104
    %s108 = sphi 0, %s107
    %s124 = sphi 0, %s108
  $region4: #{deconv_block_forward.2} parent=0 // loop_header_branch
    %13 = sbr.rel (%p11) target = $region8
  $region5: #{deconv_block_forward.2} parent=0 // loop_body
    %s15 = ssub.s32 %s10, 1
    %s16 = ssub.s32 %s10, 2
    %s23 = sadd.s32 1, %s18
    %p24 = scmp.ge.s32.totalorder %s23, 1
    %s25 = scalar_select %p24, 0, %s23
    %s26 = sadd.s32 1, %s17
    %s27 = scalar_select %p24, %s26, %s17
    %p28 = scmp.ge.s32.totalorder %s27, 2
    %s29 = scalar_select %p28, 0, %s27
    %s31 = sadd.s32 %s30, 1
    %p34 = scmp.eq.s32.totalorder %s10, 1
    %p35 = scmp.ne.s32.totalorder %s30, %s32
    %p36 = scmp.eq.s32.totalorder %s10, 0
    %p37 = por %p35, %p36
    %p38 = scmp.ne.s32.totalorder %s30, %s32
    %p39 = scmp.eq.s32.totalorder %s15, 1
    %p40 = por %p38, %p39
    %p41 = scmp.ne.s32.totalorder %s32, %s33
    %p42 = scmp.eq.s32.totalorder %s15, 0
    %p43 = por %p41, %p42
    %p44 = scmp.ne.s32.totalorder %s32, %s33
    %p45 = scmp.eq.s32.totalorder %s16, 1
    %p46 = por %p44, %p45
    %p48 = scmp.ne.s32.totalorder %s33, %s47
    %p49 = scmp.eq.s32.totalorder %s16, 0
    %p50 = por %p48, %p49
    %s52 = sadd.s32 %s51, 1
    %p55 = scmp.eq.s32.totalorder %s10, 1
    %p56 = scmp.ne.s32.totalorder %s51, %s53
    %p57 = scmp.eq.s32.totalorder %s10, 0
    %p58 = por %p56, %p57
    %p59 = scmp.ne.s32.totalorder %s51, %s53
    %p60 = scmp.eq.s32.totalorder %s15, 1
    %p61 = por %p59, %p60
    %p62 = scmp.ne.s32.totalorder %s53, %s54
    %p63 = scmp.eq.s32.totalorder %s15, 0
    %p64 = por %p62, %p63
    %p65 = scmp.ne.s32.totalorder %s53, %s54
    %p66 = scmp.eq.s32.totalorder %s16, 1
    %p67 = por %p65, %p66
    %p69 = scmp.ne.s32.totalorder %s54, %s68
    %p70 = scmp.eq.s32.totalorder %s16, 0
    %p71 = por %p69, %p70
    %s72 = ssub.s32 %s17, %s29
    %s73 = ssub.s32 %s18, %s25
    %s74 = sor.u32 %s72, %s73
    %p75 = scmp.eq.s32.totalorder %s74, 0
    %s77 = sadd.s32 %s76, 1
    %s78 = scalar_select %p75, %s76, %s77
    %p81 = pneg %p75
    %p82 = scmp.eq.s32.totalorder %s10, 1
    %p83 = por %p81, %p82
    %p84 = scmp.ne.s32.totalorder %s76, %s79
    %p85 = scmp.eq.s32.totalorder %s10, 0
    %p86 = por %p84, %p85
    %p87 = scmp.ne.s32.totalorder %s76, %s79
    %p88 = scmp.eq.s32.totalorder %s15, 1
    %p89 = por %p87, %p88
    %p90 = scmp.ne.s32.totalorder %s79, %s80
    %p91 = scmp.eq.s32.totalorder %s15, 0
    %p92 = por %p90, %p91
    %p93 = scmp.ne.s32.totalorder %s79, %s80
    %p94 = scmp.eq.s32.totalorder %s16, 1
    %p95 = por %p93, %p94
    %p97 = scmp.ne.s32.totalorder %s80, %s96
    %p98 = scmp.eq.s32.totalorder %s16, 0
    %p99 = por %p97, %p98
    %s100 = ssub.s32 %s17, %s29
    %s101 = ssub.s32 %s18, %s25
    %s102 = sor.u32 %s100, %s101
    %p103 = scmp.eq.s32.totalorder %s102, 0
    %s105 = sadd.s32 %s104, 1
    %s106 = scalar_select %p103, %s104, %s105
    %p109 = pneg %p103
    %p110 = scmp.eq.s32.totalorder %s10, 1
    %p111 = por %p109, %p110
    %p112 = scmp.ne.s32.totalorder %s104, %s107
    %p113 = scmp.eq.s32.totalorder %s10, 0
    %p114 = por %p112, %p113
    %p115 = scmp.ne.s32.totalorder %s104, %s107
    %p116 = scmp.eq.s32.totalorder %s15, 1
    %p117 = por %p115, %p116
    %p118 = scmp.ne.s32.totalorder %s107, %s108
    %p119 = scmp.eq.s32.totalorder %s15, 0
    %p120 = por %p118, %p119
    %p121 = scmp.ne.s32.totalorder %s107, %s108
    %p122 = scmp.eq.s32.totalorder %s16, 1
    %p123 = por %p121, %p122
    %p125 = scmp.ne.s32.totalorder %s108, %s124
    %p126 = scmp.eq.s32.totalorder %s16, 0
    %p127 = por %p125, %p126
    %p128 = scmp.le.s32.totalorder 1, %s10
    %p129 = scmp.lt.s32.totalorder %s10, 3
    %p130 = pnand %p128, %p129
    %p131 = pneg %p130
    // Predicated region
    $region9: #{deconv_block_forward.2} parent=5 // pred_check
      _
    $region10: #{deconv_block_forward.2} parent=5 // pred_check_branch
      %133 = sbr.rel (%p130) target = $region12
    $region11: #{deconv_block_forward.2} parent=5 // pred_region
      %s134 = ssub.s32 %s10, 1
      // Predicated region
      $region13: #{deconv_block_forward.2} parent=11 // pred_check
        %p135 = pneg %p43
      $region14: #{deconv_block_forward.2} parent=11 // pred_check_branch
        %137 = sbr.rel (%p135) target = $region16
      $region15: #{deconv_block_forward.2} parent=11 // pred_region
        _
      $region16: #{deconv_block_forward.2} parent=11 // pred_fallthru
        _
      // Predicated region
      $region17: #{deconv_block_forward.2} parent=11 // pred_check
        %p138 = pneg %p64
      $region18: #{deconv_block_forward.2} parent=11 // pred_check_branch
        %140 = sbr.rel (%p138) target = $region20
      $region19: #{deconv_block_forward.2} parent=11 // pred_region
        _
      $region20: #{deconv_block_forward.2} parent=11 // pred_fallthru
        _
    $region12: #{deconv_block_forward.2} parent=5 // pred_fallthru
      _
    %p141 = scmp.lt.s32.totalorder %s10, 2
    // Predicated region
    $region21: #{deconv_block_forward.2} parent=5 // pred_check
      %p142 = pneg %p141
    $region22: #{deconv_block_forward.2} parent=5 // pred_check_branch
      %144 = sbr.rel (%p142) target = $region24
    $region23: #{deconv_block_forward.2} parent=5 // pred_region
      // Predicated region
      $region25: #{deconv_block_forward.2} parent=23 // pred_check
        %p145 = pneg %p86
      $region26: #{deconv_block_forward.2} parent=23 // pred_check_branch
        %147 = sbr.rel (%p145) target = $region28
      $region27: #{deconv_block_forward.2} parent=23 // pred_region
        %p148 = scmp.lt.s32.totalorder %s17, 1
        %s149 = scalar_select %p148, %s17, 1
        %p150 = scmp.lt.s32.totalorder %s18, 0
        %s151 = scalar_select %p150, %s18, 0
        %s152 = smul.addr %s149, 8
        %s153 = sadd.s32 %s151, %s152
        %s154 = smul.addr %s153, 4
        %s155 = scalar_lea.vmem %s2, %s154
      $region28: #{deconv_block_forward.2} parent=23 // pred_fallthru
        _
    $region24: #{deconv_block_forward.2} parent=5 // pred_fallthru
      _
    %p156 = scmp.le.s32.totalorder 1, %s10
    %p157 = scmp.lt.s32.totalorder %s10, 3
    %p158 = pnand %p156, %p157
    %p159 = pneg %p158
    // Predicated region
    $region29: #{deconv_block_forward.2} parent=5 // pred_check
      _
    $region30: #{deconv_block_forward.2} parent=5 // pred_check_branch
      %161 = sbr.rel (%p158) target = $region32
    $region31: #{deconv_block_forward.2} parent=5 // pred_region
      %s162 = ssub.s32 %s10, 1
      %p163 = pneg %p43
      %p164 = pneg %p40
      %p165 = pneg %p64
      %p166 = pneg %p61
      %p167 = scmp.lt.s32.totalorder %s19, 1
      %s168 = scalar_select %p167, %s19, 1
      %p169 = scmp.lt.s32.totalorder %s20, 0
      %s170 = scalar_select %p169, %s20, 0
      %s171 = smul.addr %s168, 8
      %s172 = sadd.s32 %s170, %s171
      %s173 = smul.addr %s172, 4
      %s174 = scalar_lea.vmem %s2, %s173
      %p175 = pneg %p92
      %p176 = pneg %p89
      %p177 = pneg %p120
      %p178 = pneg %p117
      %p179 = scmp.lt.s32.totalorder %s19, 1
      %s180 = scalar_select %p179, %s19, 1
      %p181 = scmp.lt.s32.totalorder %s20, 0
      %s182 = scalar_select %p181, %s20, 0
      %s183 = sadd.s32 %s182, %s180
      %s184 = smul.addr %s183, 4
      %s185 = scalar_lea.vmem %s3, %s184
      %p186 = scmp.lt.s32.totalorder %s19, 1
      %s187 = scalar_select %p186, %s19, 1
      %p188 = scmp.lt.s32.totalorder %s20, 0
      %s189 = scalar_select %p188, %s20, 0
      %s190 = smul.addr %s187, 8
      %s191 = sadd.s32 %s189, %s190
      %s192 = smul.addr %s191, 4
      %s193 = scalar_lea.vmem %s2, %s192
      %p194 = scmp.lt.s32.totalorder %s19, 1
      %s195 = scalar_select %p194, %s19, 1
      %p196 = scmp.lt.s32.totalorder %s20, 0
      %s197 = scalar_select %p196, %s20, 0
      %s198 = sadd.s32 %s197, %s195
      %s199 = smul.addr %s198, 4
      %s200 = scalar_lea.vmem %s3, %s199
      %s202 = sld [smem:[#allocation2]]
      %v203 = vld [vmem:[%s193] sm:$0xf]
      %v204 = vld [vmem:[%s193 + $0x4] sm:$0xf]
      %v205 = vld [vmem:[%s193 + $0x8] sm:$0xf]
      %v206 = vld [vmem:[%s193 + $0xc] sm:$0xf]
      %v207 = vld [vmem:[%s193 + $0x10] sm:$0xf]
      %v208 = vld [vmem:[%s193 + $0x14] sm:$0xf]
      %v209 = vld [vmem:[%s193 + $0x18] sm:$0xf]
      %v210 = vld [vmem:[%s193 + $0x1c] sm:$0xf]
      %v211 = vunpack.c.l.bf16 %v203
      %v212 = vunpack.c.l.bf16 %v204
      %v213 = vunpack.c.l.bf16 %v205
      %v214 = vunpack.c.l.bf16 %v206
      %v215 = vunpack.c.l.bf16 %v207
      %v216 = vunpack.c.l.bf16 %v208
      %v217 = vunpack.c.l.bf16 %v209
      %v218 = vunpack.c.l.bf16 %v210
      %vm219 = vcmp.gt.f32.partialorder %v211, 0.0
      %vm220 = vcmp.gt.f32.partialorder %v212, 0.0
      %vm221 = vcmp.gt.f32.partialorder %v213, 0.0
      %vm222 = vcmp.gt.f32.partialorder %v214, 0.0
      %vm223 = vcmp.gt.f32.partialorder %v215, 0.0
      %vm224 = vcmp.gt.f32.partialorder %v216, 0.0
      %vm225 = vcmp.gt.f32.partialorder %v217, 0.0
      %vm226 = vcmp.gt.f32.partialorder %v218, 0.0
      %v227 = vstv %s202
      %v228 = vmul.f32 %v227, %v211
      %v229 = vmul.f32 %v227, %v212
      %v230 = vmul.f32 %v227, %v213
      %v231 = vmul.f32 %v227, %v214
      %v232 = vmul.f32 %v227, %v215
      %v233 = vmul.f32 %v227, %v216
      %v234 = vmul.f32 %v227, %v217
      %v235 = vmul.f32 %v227, %v218
      %v236 = vsel %vm219, %v211, %v228
      %v237 = vsel %vm220, %v212, %v229
      %v238 = vsel %vm221, %v213, %v230
      %v239 = vsel %vm222, %v214, %v231
      %v240 = vsel %vm223, %v215, %v232
      %v241 = vsel %vm224, %v216, %v233
      %v242 = vsel %vm225, %v217, %v234
      %v243 = vsel %vm226, %v218, %v235
      %v244 = vld [vmem:[%s1] sm:$0xf]
      %v245 = vpack.c.bf16 %v237, %v236
      %v246 = vpack.c.bf16 %v239, %v238
      %v247 = vpack.c.bf16 %v241, %v240
      %v248 = vpack.c.bf16 %v243, %v242
      %vm249 = vcmask 523264
      %v251 = vsel %vm249, %v244, 0
      %253 = vmatprep.subr.bf16.mxu0 0
      %254 = vmatpush1.bf16.msra.mxu0 %v245
      %255 = vmatprep.subr.bf16.mxu0 0
      %256 = vmatpush1.bf16.msra.mxu0 %v246
      %257 = vmatprep.subr.bf16.mxu0 0
      %258 = vmatpush1.bf16.msra.mxu0 %v247
      %259 = vmatprep.subr.bf16.mxu0 0
      %260 = vmatpush1.bf16.msra.mxu0 %v248
      %261 = vmatprep.subr.bf16.mxu0 0
      %262 = vmatpush1.bf16.msra.mxu0 0
      %263 = vmatprep.subr.bf16.mxu0 0
      %264 = vmatpush1.bf16.msra.mxu0 0
      %265 = vmatprep.subr.bf16.mxu0 0
      %266 = vmatpush1.bf16.msra.mxu0 0
      %267 = vmatprep.subr.bf16.mxu0 0
      %268 = vmatpush1.bf16.msra.mxu0 0
      %269 = vmatprep.subr.bf16.mxu0 0
      %270 = vmatpush1.bf16.msra.mxu0 0
      %271 = vmatprep.subr.bf16.mxu0 0
      %272 = vmatpush1.bf16.msra.mxu0 0
      %273 = vmatprep.subr.bf16.mxu0 0
      %274 = vmatpush1.bf16.msra.mxu0 0
      %275 = vmatprep.subr.bf16.mxu0 0
      %276 = vmatpush1.bf16.msra.mxu0 0
      %277 = vmatprep.subr.bf16.mxu0 0
      %278 = vmatpush1.bf16.msra.mxu0 0
      %279 = vmatprep.subr.bf16.mxu0 0
      %280 = vmatpush1.bf16.msra.mxu0 0
      %281 = vmatprep.subr.bf16.mxu0 0
      %282 = vmatpush1.bf16.msra.mxu0 0
      %283 = vmatprep.subr.bf16.mxu0 0
      %284 = vmatpush1.bf16.msra.mxu0 0
      %285 = vmatprep.mubr.bf16.mxu0 0
      %286 = vmatmul.mubr.bf16.gmra.mrb[0].mxu0 %v251
      %v287 = vpop.f32.mrb[0].mxu0
      %v288 = vadd.f32 0.0, %v287
      %v289 = vpop.f32.mrb[0].mxu0
      %v290 = vpop.f32.mrb[0].mxu0
      %v291 = vpop.f32.mrb[0].mxu0
      %292 = vdwg.mxu0
      %v293 = vpack.c.bf16 %v288, %v288
      %vm294 = vcmask 519168
      %295 = vst.msk [vmem:[%s200] sm:$0xf] %vm294, %v293
      %p296 = scmp.lt.s32.totalorder %s19, 1
      %s297 = scalar_select %p296, %s19, 1
      %p298 = scmp.lt.s32.totalorder %s20, 0
      %s299 = scalar_select %p298, %s20, 0
      %s300 = sadd.s32 %s299, %s297
      %s301 = smul.addr %s300, 4
      %s302 = scalar_lea.vmem %s3, %s301
      // Predicated region
      $region33: #{deconv_block_forward.2} parent=31 // pred_check
        %p303 = pneg %p117
      $region34: #{deconv_block_forward.2} parent=31 // pred_check_branch
        %305 = sbr.rel (%p303) target = $region36
      $region35: #{deconv_block_forward.2} parent=31 // pred_region
        _
      $region36: #{deconv_block_forward.2} parent=31 // pred_fallthru
        _
    $region32: #{deconv_block_forward.2} parent=5 // pred_fallthru
      _
    %p306 = scmp.le.s32.totalorder 2, %s10
    // Predicated region
    $region37: #{deconv_block_forward.2} parent=5 // pred_check
      %p307 = pneg %p306
    $region38: #{deconv_block_forward.2} parent=5 // pred_check_branch
      %309 = sbr.rel (%p307) target = $region40
    $region39: #{deconv_block_forward.2} parent=5 // pred_region
      %s310 = ssub.s32 %s10, 2
      // Predicated region
      $region41: #{deconv_block_forward.2} parent=39 // pred_check
        %p311 = pneg %p123
      $region42: #{deconv_block_forward.2} parent=39 // pred_check_branch
        %313 = sbr.rel (%p311) target = $region44
      $region43: #{deconv_block_forward.2} parent=39 // pred_region
        %p314 = scmp.lt.s32.totalorder %s21, 1
        %s315 = scalar_select %p314, %s21, 1
        %p316 = scmp.lt.s32.totalorder %s22, 0
        %s317 = scalar_select %p316, %s22, 0
        %s318 = sadd.s32 %s317, %s315
        %s319 = smul.addr %s318, 4
        %s320 = scalar_lea.vmem %s3, %s319
      $region44: #{deconv_block_forward.2} parent=39 // pred_fallthru
        _
    $region40: #{deconv_block_forward.2} parent=5 // pred_fallthru
      _
  $region6: #{deconv_block_forward.2} parent=0 // loop_footer
    %s14 = sadd.s32 1, %s10
  $region7: #{deconv_block_forward.2} parent=0 // loop_footer_branch
    %9 = sbr.rel target = $region3
  $region8: #{deconv_block_forward.2} parent=0 // loop_exit
    _

// kernel: deconv_block_forward.3
$region0: #{deconv_block_forward.3}
  #allocation0 [shape = 'u32[]', space=smem, size = 0x4, offset = 0x4, fixed_abs, tag = 'smem constant byte address 0x4 - core index']
  #allocation1 [shape = 'u32[144,128]{1,0:T(1,128)}', space=vmem, size = 0x12000, scoped, tag = 'internal scratch']
  #allocation2 [shape = 'f32[64,32]{1,0:T(8,128)}', space=vmem, size = 0x8000, scoped, tag = 'scratch operand']
  %s0 = inlined_call_operand.vmem [shape: f32[8], index: 0, kind: input, shape index: {}]
  %s1 = inlined_call_operand.vmem [shape: bf16[2,64,8], index: 1, kind: input, shape index: {}]
  %s2 = inlined_call_operand.vmem [shape: bf16[8,32], index: 2, kind: input, shape index: {}]
  %s3 = inlined_call_operand.vmem [shape: bf16[32,8], index: 3, kind: input, shape index: {}]
  %s4 = inlined_call_operand.hbm [shape: f32[2,8,32,32], index: 4, kind: output, shape index: {}]
  %s5 = sld [smem:[#allocation0]]
  $region64: #{deconv_block_forward.3} parent=0
    _
  %s7 = ssub.s32 1, %s5
  %s8 = scalar_select 0, %s7, %s5
  $region1: #{deconv_block_forward.3} parent=0
    #allocation3 [shape = 'u8[512]{0}', space=smem, size = 0x200, scoped, tag = 'input window, operand 0, single buffered']
    #allocation4 [shape = 's32[2]{0}', space=sflag, size = 0x8, scoped, tag = 'scoped memory for deconv_block_forward.3']
    #allocation5 [shape = 's32[2]{0}', space=sflag, size = 0x8, scoped, tag = 'scoped memory for deconv_block_forward.3']
    #allocation6 [shape = 'u8[262144]{0}', space=vmem, size = 0x40000, scoped, tag = 'output window, operand 0']
    %9 = vsyncpa [#allocation5], 0
    %10 = vsyncpa [#allocation4], 0
    %s11 = scalar_lea.sflag [#allocation4], 1
    %12 = vsyncpa %s11, 0
    loop: start=0, step=1, limit=4
    $region2: #{deconv_block_forward.3} parent=1 // loop_pre_header
      _
    $region3: #{deconv_block_forward.3} parent=1 // loop_header
      %s14 = sphi 0, %s18
      %p15 = scmp.ge.s32.totalorder %s14, 4
      %s21 = sphi 0, %s33
      %s22 = sphi 0, %s29
      %s23 = sphi 0, %s21
      %s24 = sphi 0, %s22
      %s25 = sphi 0, %s23
      %s26 = sphi 0, %s24
      %s34 = sphi 0, %s34
      %s36 = sphi 0, %s34
      %s37 = sphi 0, %s36
      %s51 = sphi 0, %s37
      %s57 = sphi 0, %s59
      %s60 = sphi 0, %s57
      %s61 = sphi 0, %s60
      %s77 = sphi 0, %s61
      %s81 = sphi 0, %s81
      %s83 = sphi 0, %s81
      %s84 = sphi 0, %s83
      %s98 = sphi 0, %s84
      %s104 = sphi 0, %s106
      %s107 = sphi 0, %s104
      %s108 = sphi 0, %s107
      %s124 = sphi 0, %s108
      %s132 = sphi 0, %s134
      %s135 = sphi 0, %s132
      %s136 = sphi 0, %s135
      %s152 = sphi 0, %s136
    $region4: #{deconv_block_forward.3} parent=1 // loop_header_branch
      %17 = sbr.rel (%p15) target = $region8
    $region5: #{deconv_block_forward.3} parent=1 // loop_body
      %s19 = ssub.s32 %s14, 1
      %s20 = ssub.s32 %s14, 2
      %s27 = sadd.s32 1, %s22
      %p28 = scmp.ge.s32.totalorder %s27, 1
      %s29 = scalar_select %p28, 0, %s27
      %s30 = sadd.s32 1, %s21
      %s31 = scalar_select %p28, %s30, %s21
      %p32 = scmp.ge.s32.totalorder %s31, 2
      %s33 = scalar_select %p32, 0, %s31
      %s35 = sadd.s32 %s34, 1
      %p38 = scmp.eq.s32.totalorder %s14, 1
      %p39 = scmp.ne.s32.totalorder %s34, %s36
      %p40 = scmp.eq.s32.totalorder %s14, 0
      %p41 = por %p39, %p40
      %p42 = scmp.ne.s32.totalorder %s34, %s36
      %p43 = scmp.eq.s32.totalorder %s19, 1
      %p44 = por %p42, %p43
      %p45 = scmp.ne.s32.totalorder %s36, %s37
      %p46 = scmp.eq.s32.totalorder %s19, 0
      %p47 = por %p45, %p46
      %p48 = scmp.ne.s32.totalorder %s36, %s37
      %p49 = scmp.eq.s32.totalorder %s20, 1
      %p50 = por %p48, %p49
      %p52 = scmp.ne.s32.totalorder %s37, %s51
      %p53 = scmp.eq.s32.totalorder %s20, 0
      %p54 = por %p52, %p53
      %s55 = ssub.s32 %s21, %s33
      %p56 = scmp.eq.s32.totalorder %s55, 0
      %s58 = sadd.s32 %s57, 1
      %s59 = scalar_select %p56, %s57, %s58
      %p62 = pneg %p56
      %p63 = scmp.eq.s32.totalorder %s14, 1
      %p64 = por %p62, %p63
      %p65 = scmp.ne.s32.totalorder %s57, %s60
      %p66 = scmp.eq.s32.totalorder %s14, 0
      %p67 = por %p65, %p66
      %p68 = scmp.ne.s32.totalorder %s57, %s60
      %p69 = scmp.eq.s32.totalorder %s19, 1
      %p70 = por %p68, %p69
      %p71 = scmp.ne.s32.totalorder %s60, %s61
      %p72 = scmp.eq.s32.totalorder %s19, 0
      %p73 = por %p71, %p72
      %p74 = scmp.ne.s32.totalorder %s60, %s61
      %p75 = scmp.eq.s32.totalorder %s20, 1
      %p76 = por %p74, %p75
      %p78 = scmp.ne.s32.totalorder %s61, %s77
      %p79 = scmp.eq.s32.totalorder %s20, 0
      %p80 = por %p78, %p79
      %s82 = sadd.s32 %s81, 1
      %p85 = scmp.eq.s32.totalorder %s14, 1
      %p86 = scmp.ne.s32.totalorder %s81, %s83
      %p87 = scmp.eq.s32.totalorder %s14, 0
      %p88 = por %p86, %p87
      %p89 = scmp.ne.s32.totalorder %s81, %s83
      %p90 = scmp.eq.s32.totalorder %s19, 1
      %p91 = por %p89, %p90
      %p92 = scmp.ne.s32.totalorder %s83, %s84
      %p93 = scmp.eq.s32.totalorder %s19, 0
      %p94 = por %p92, %p93
      %p95 = scmp.ne.s32.totalorder %s83, %s84
      %p96 = scmp.eq.s32.totalorder %s20, 1
      %p97 = por %p95, %p96
      %p99 = scmp.ne.s32.totalorder %s84, %s98
      %p100 = scmp.eq.s32.totalorder %s20, 0
      %p101 = por %p99, %p100
      %s102 = ssub.s32 %s22, %s29
      %p103 = scmp.eq.s32.totalorder %s102, 0
      %s105 = sadd.s32 %s104, 1
      %s106 = scalar_select %p103, %s104, %s105
      %p109 = pneg %p103
      %p110 = scmp.eq.s32.totalorder %s14, 1
      %p111 = por %p109, %p110
      %p112 = scmp.ne.s32.totalorder %s104, %s107
      %p113 = scmp.eq.s32.totalorder %s14, 0
      %p114 = por %p112, %p113
      %p115 = scmp.ne.s32.totalorder %s104, %s107
      %p116 = scmp.eq.s32.totalorder %s19, 1
      %p117 = por %p115, %p116
      %p118 = scmp.ne.s32.totalorder %s107, %s108
      %p119 = scmp.eq.s32.totalorder %s19, 0
      %p120 = por %p118, %p119
      %p121 = scmp.ne.s32.totalorder %s107, %s108
      %p122 = scmp.eq.s32.totalorder %s20, 1
      %p123 = por %p121, %p122
      %p125 = scmp.ne.s32.totalorder %s108, %s124
      %p126 = scmp.eq.s32.totalorder %s20, 0
      %p127 = por %p125, %p126
      %s128 = ssub.s32 %s21, %s33
      %s129 = ssub.s32 %s22, %s29
      %s130 = sor.u32 %s128, %s129
      %p131 = scmp.eq.s32.totalorder %s130, 0
      %s133 = sadd.s32 %s132, 1
      %s134 = scalar_select %p131, %s132, %s133
      %p137 = pneg %p131
      %p138 = scmp.eq.s32.totalorder %s14, 1
      %p139 = por %p137, %p138
      %p140 = scmp.ne.s32.totalorder %s132, %s135
      %p141 = scmp.eq.s32.totalorder %s14, 0
      %p142 = por %p140, %p141
      %p143 = scmp.ne.s32.totalorder %s132, %s135
      %p144 = scmp.eq.s32.totalorder %s19, 1
      %p145 = por %p143, %p144
      %p146 = scmp.ne.s32.totalorder %s135, %s136
      %p147 = scmp.eq.s32.totalorder %s19, 0
      %p148 = por %p146, %p147
      %p149 = scmp.ne.s32.totalorder %s135, %s136
      %p150 = scmp.eq.s32.totalorder %s20, 1
      %p151 = por %p149, %p150
      %p153 = scmp.ne.s32.totalorder %s136, %s152
      %p154 = scmp.eq.s32.totalorder %s20, 0
      %p155 = por %p153, %p154
      %p156 = scmp.le.s32.totalorder 1, %s14
      %p157 = scmp.lt.s32.totalorder %s14, 3
      %p158 = pnand %p156, %p157
      %p159 = pneg %p158
      // Predicated region
      $region9: #{deconv_block_forward.3} parent=5 // pred_check
        _
      $region10: #{deconv_block_forward.3} parent=5 // pred_check_branch
        %161 = sbr.rel (%p158) target = $region12
      $region11: #{deconv_block_forward.3} parent=5 // pred_region
        %s162 = ssub.s32 %s14, 1
        // Predicated region
        $region13: #{deconv_block_forward.3} parent=11 // pred_check
          %p163 = pneg %p47
        $region14: #{deconv_block_forward.3} parent=11 // pred_check_branch
          %165 = sbr.rel (%p163) target = $region16
        $region15: #{deconv_block_forward.3} parent=11 // pred_region
          %s167 = ssub.s32 16, 16
          %168 = vsyncadd [#allocation5], %s167
          %s170 = sshll.u32 %s0, 4
          %s171 = int_to_ptr.vmem [resolvable:$true] %s170
          %173 = dma.vmem_to_smem %s171, 16, [#allocation3], [#allocation5]
        $region16: #{deconv_block_forward.3} parent=11 // pred_fallthru
          _
        // Predicated region
        $region17: #{deconv_block_forward.3} parent=11 // pred_check
          %p174 = pneg %p94
        $region18: #{deconv_block_forward.3} parent=11 // pred_check_branch
          %176 = sbr.rel (%p174) target = $region20
        $region19: #{deconv_block_forward.3} parent=11 // pred_region
          _
        $region20: #{deconv_block_forward.3} parent=11 // pred_fallthru
          _
        // Predicated region
        $region21: #{deconv_block_forward.3} parent=11 // pred_check
          %p177 = pneg %p120
        $region22: #{deconv_block_forward.3} parent=11 // pred_check_branch
          %179 = sbr.rel (%p177) target = $region24
        $region23: #{deconv_block_forward.3} parent=11 // pred_region
          %s180 = smul.u32 4, %s24
          %p181 = scmp.lt.s32.totalorder %s180, 3
          %s182 = scalar_select %p181, %s180, 3
          %s183 = smul.addr %s182, 4
          %s184 = scalar_lea.vmem %s3, %s183
          %s185 = smul.u32 4, %s24
        $region24: #{deconv_block_forward.3} parent=11 // pred_fallthru
          _
      $region12: #{deconv_block_forward.3} parent=5 // pred_fallthru
        _
      %p186 = scmp.lt.s32.totalorder %s14, 2
      // Predicated region
      $region25: #{deconv_block_forward.3} parent=5 // pred_check
        %p187 = pneg %p186
      $region26: #{deconv_block_forward.3} parent=5 // pred_check_branch
        %189 = sbr.rel (%p187) target = $region28
      $region27: #{deconv_block_forward.3} parent=5 // pred_region
        // Predicated region
        $region29: #{deconv_block_forward.3} parent=27 // pred_check
          %p190 = pneg %p67
        $region30: #{deconv_block_forward.3} parent=27 // pred_check_branch
          %192 = sbr.rel (%p190) target = $region32
        $region31: #{deconv_block_forward.3} parent=27 // pred_region
          %p193 = scmp.lt.s32.totalorder %s21, 1
          %s194 = scalar_select %p193, %s21, 1
          %s195 = smul.addr %s194, 8
          %s196 = smul.addr %s195, 4
          %s197 = scalar_lea.vmem %s1, %s196
        $region32: #{deconv_block_forward.3} parent=27 // pred_fallthru
          _
      $region28: #{deconv_block_forward.3} parent=5 // pred_fallthru
        _
      %p198 = scmp.le.s32.totalorder 1, %s14
      %p199 = scmp.lt.s32.totalorder %s14, 3
      %p200 = pnand %p198, %p199
      %p201 = pneg %p200
      // Predicated region
      $region33: #{deconv_block_forward.3} parent=5 // pred_check
        _
      $region34: #{deconv_block_forward.3} parent=5 // pred_check_branch
        %203 = sbr.rel (%p200) target = $region36
      $region35: #{deconv_block_forward.3} parent=5 // pred_region
        %s204 = ssub.s32 %s14, 1
        // Predicated region
        $region37: #{deconv_block_forward.3} parent=35 // pred_check
          %p205 = pneg %p47
        $region38: #{deconv_block_forward.3} parent=35 // pred_check_branch
          %207 = sbr.rel (%p205) target = $region40
        $region39: #{deconv_block_forward.3} parent=35 // pred_region
          %208 = dma.done [#allocation5], 16
        $region40: #{deconv_block_forward.3} parent=35 // pred_fallthru
          _
        %209 = sfence
        %p210 = pneg %p47
        %p211 = pneg %p44
        %p212 = scmp.lt.s32.totalorder %s23, 1
        %s213 = scalar_select %p212, %s23, 1
        %s214 = smul.addr %s213, 8
        %s215 = smul.addr %s214, 4
        %s216 = scalar_lea.vmem %s1, %s215
        %p217 = pneg %p73
        %p218 = pneg %p70
        %p219 = pneg %p94
        %p220 = pneg %p91
        %s221 = smul.u32 4, %s24
        %p222 = scmp.lt.s32.totalorder %s221, 3
        %s223 = scalar_select %p222, %s221, 3
        %s224 = smul.addr %s223, 4
        %s225 = scalar_lea.vmem %s3, %s224
        %p226 = pneg %p120
        %p227 = pneg %p117
        %p228 = pneg %p148
        %p229 = pneg %p145
        %s230 = sand.u32 %s135, 1
        %s231 = scalar_lea.sflag [#allocation4], %s230
        %s232 = sand.u32 %s135, 1
        %s233 = smul.addr %s232, 256
        %s234 = scalar_lea.vmem [#allocation6], %s233
        %p235 = scmp.lt.s32.totalorder %s23, 1
        %s236 = scalar_select %p235, %s23, 1
        %s237 = smul.addr %s236, 8
        %s238 = smul.addr %s237, 4
        %s239 = scalar_lea.vmem %s1, %s238
        %s240 = smul.u32 4, %s24
        %p241 = scmp.lt.s32.totalorder %s240, 3
        %s242 = scalar_select %p241, %s240, 3
        %s243 = smul.addr %s242, 4
        %s244 = scalar_lea.vmem %s3, %s243
        %s245 = smul.u32 4, %s24
        %s246 = smul.u32 4, %s24
        %p248 = scmp.eq.s32.totalorder %s24, 0
        // Predicated region
        $region41: #{deconv_block_forward.3} parent=35 // pred_check
          %p249 = pneg %p248
        $region42: #{deconv_block_forward.3} parent=35 // pred_check_branch
          %251 = sbr.rel (%p249) target = $region44
        $region43: #{deconv_block_forward.3} parent=35 // pred_region
          %v252 = vld [vmem:[%s239] sm:$0xf]
          %v253 = vld [vmem:[%s239 + $0x4] sm:$0xf]
          %v254 = vld [vmem:[%s239 + $0x8] sm:$0xf]
          %v255 = vld [vmem:[%s239 + $0xc] sm:$0xf]
          %v256 = vld [vmem:[%s239 + $0x10] sm:$0xf]
          %v257 = vld [vmem:[%s239 + $0x14] sm:$0xf]
          %v258 = vld [vmem:[%s239 + $0x18] sm:$0xf]
          %v259 = vld [vmem:[%s239 + $0x1c] sm:$0xf]
          %v260 = vld [vmem:[%s2] sm:$0xf]
          %v269 = vunpack.c.l.b16 %v252
          %v270 = vunpack.c.l.b16 %v253
          %v271 = vunpack.c.l.b16 %v254
          %v272 = vunpack.c.l.b16 %v255
          %v273 = vunpack.c.l.b16 %v256
          %v274 = vunpack.c.l.b16 %v257
          %v275 = vunpack.c.l.b16 %v258
          %v276 = vunpack.c.l.b16 %v259
          %v277 = vpack.c.b16 %v270, %v269
          %v278 = vpack.c.b16 %v272, %v271
          %v279 = vpack.c.b16 %v274, %v273
          %v280 = vpack.c.b16 %v276, %v275
          %vm281 = vcmask 64512
          %v283 = vsel %vm281, %v277, 0
          %v286 = vsel %vm281, %v278, 0
          %v289 = vsel %vm281, %v279, 0
          %v292 = vsel %vm281, %v280, 0
          %vm294 = vcmask 1043456
          %v296 = vsel %vm294, %v260, 0
          %298 = vmatprep.subr.bf16.mxu0 0
          %299 = vmatpush1.bf16.msra.mxu0 %v296
          %300 = vmatprep.subr.bf16.mxu0 0
          %301 = vmatpush1.bf16.msra.mxu0 0
          %302 = vmatprep.subr.bf16.mxu0 0
          %303 = vmatpush1.bf16.msra.mxu0 0
          %304 = vmatprep.subr.bf16.mxu0 0
          %305 = vmatpush1.bf16.msra.mxu0 0
          %306 = vmatprep.subr.bf16.mxu0 0
          %307 = vmatpush1.bf16.msra.mxu0 0
          %308 = vmatprep.subr.bf16.mxu0 0
          %309 = vmatpush1.bf16.msra.mxu0 0
          %310 = vmatprep.subr.bf16.mxu0 0
          %311 = vmatpush1.bf16.msra.mxu0 0
          %312 = vmatprep.subr.bf16.mxu0 0
          %313 = vmatpush1.bf16.msra.mxu0 0
          %314 = vmatprep.subr.bf16.mxu0 0
          %315 = vmatpush1.bf16.msra.mxu0 0
          %316 = vmatprep.subr.bf16.mxu0 0
          %317 = vmatpush1.bf16.msra.mxu0 0
          %318 = vmatprep.subr.bf16.mxu0 0
          %319 = vmatpush1.bf16.msra.mxu0 0
          %320 = vmatprep.subr.bf16.mxu0 0
          %321 = vmatpush1.bf16.msra.mxu0 0
          %322 = vmatprep.subr.bf16.mxu0 0
          %323 = vmatpush1.bf16.msra.mxu0 0
          %324 = vmatprep.subr.bf16.mxu0 0
          %325 = vmatpush1.bf16.msra.mxu0 0
          %326 = vmatprep.subr.bf16.mxu0 0
          %327 = vmatpush1.bf16.msra.mxu0 0
          %328 = vmatprep.subr.bf16.mxu0 0
          %329 = vmatpush1.bf16.msra.mxu0 0
          %330 = vmatprep.mubr.bf16.mxu0 0
          %331 = vmatmul.mubr.bf16.gmra.mrb[0].mxu0 %v283
          %v332 = vpop.f32.mrb[0].mxu0
          %v333 = vadd.f32 0.0, %v332
          %v334 = vpop.f32.mrb[0].mxu0
          %v335 = vpop.f32.mrb[0].mxu0
          %v336 = vadd.f32 0.0, %v335
          %v337 = vpop.f32.mrb[0].mxu0
          %338 = vmatprep.mubr.bf16.mxu0 0
          %339 = vmatmul.mubr.bf16.gmra.mrb[0].mxu0 %v286
          %v340 = vpop.f32.mrb[0].mxu0
          %v341 = vadd.f32 0.0, %v340
          %v342 = vpop.f32.mrb[0].mxu0
          %v343 = vpop.f32.mrb[0].mxu0
          %v344 = vadd.f32 0.0, %v343
          %v345 = vpop.f32.mrb[0].mxu0
          %346 = vmatprep.mubr.bf16.mxu0 0
          %347 = vmatmul.mubr.bf16.gmra.mrb[0].mxu0 %v289
          %v348 = vpop.f32.mrb[0].mxu0
          %v349 = vadd.f32 0.0, %v348
          %v350 = vpop.f32.mrb[0].mxu0
          %v351 = vpop.f32.mrb[0].mxu0
          %v352 = vadd.f32 0.0, %v351
          %v353 = vpop.f32.mrb[0].mxu0
          %354 = vmatprep.mubr.bf16.mxu0 0
          %355 = vmatmul.mubr.bf16.gmra.mrb[0].mxu0 %v292
          %v356 = vpop.f32.mrb[0].mxu0
          %v357 = vadd.f32 0.0, %v356
          %v358 = vpop.f32.mrb[0].mxu0
          %v359 = vpop.f32.mrb[0].mxu0
          %v360 = vadd.f32 0.0, %v359
          %v361 = vpop.f32.mrb[0].mxu0
          %362 = vdwg.mxu0
          %vm363 = vcmask 261120
          %364 = vst.msk [vmem:[#allocation2] sm:$0xff] %vm363, %v333
          %365 = vst.msk [vmem:[#allocation2 + $0x8] sm:$0xff] %vm363, %v336
          %366 = vst.msk [vmem:[#allocation2 + $0x10] sm:$0xff] %vm363, %v341
          %367 = vst.msk [vmem:[#allocation2 + $0x18] sm:$0xff] %vm363, %v344
          %368 = vst.msk [vmem:[#allocation2 + $0x20] sm:$0xff] %vm363, %v349
          %369 = vst.msk [vmem:[#allocation2 + $0x28] sm:$0xff] %vm363, %v352
          %370 = vst.msk [vmem:[#allocation2 + $0x30] sm:$0xff] %vm363, %v357
          %371 = vst.msk [vmem:[#allocation2 + $0x38] sm:$0xff] %vm363, %v360
        $region44: #{deconv_block_forward.3} parent=35 // pred_fallthru
          _
        %v372 = vld [vmem:[%s244] sm:$0xf]
        %v373 = vld [vmem:[%s244 + $0x4] sm:$0xf]
        %v374 = vld [vmem:[%s244 + $0x8] sm:$0xf]
        %v375 = vld [vmem:[%s244 + $0xc] sm:$0xf]
        loop: start=0, step=1, limit=8
        $region45: #{deconv_block_forward.3} parent=35 // loop_pre_header
          _
        $region46: #{deconv_block_forward.3} parent=35 // loop_header
          %s377 = sphi 0, %s381
          %p378 = scmp.ge.s32.totalorder %s377, 8
        $region47: #{deconv_block_forward.3} parent=35 // loop_header_branch
          %380 = sbr.rel (%p378) target = $region51
        $region48: #{deconv_block_forward.3} parent=35 // loop_body
          %s382 = smul.u32 %s377, 8
          %s383 = scalar_lea.vmem [#allocation2], %s382
          %v384 = vld [vmem:[%s383] sm:$0xff]
          %v385 = vpack.c.bf16 %v384, %v384
          %s386 = sld [smem:[#allocation3 + %s377]]
          %v387 = vstv %s386
          %v392 = vunpack.c.l.b16 %v372
          %v393 = vunpack.c.l.b16 %v373
          %v394 = vunpack.c.l.b16 %v374
          %v395 = vunpack.c.l.b16 %v375
          %v396 = vpack.c.b16 %v393, %v392
          %v397 = vpack.c.b16 %v395, %v394
          %vm398 = vcmask 64512
          %v400 = vsel %vm398, %v396, 0
          %v403 = vsel %vm398, %v397, 0
          %vm405 = vcmask 1043456
          %v407 = vsel %vm405, %v385, 0
          %409 = vmatprep.subr.bf16.mxu0 0
          %410 = vmatpush1.bf16.msra.mxu0 %v407
          %411 = vmatprep.subr.bf16.mxu0 0
          %412 = vmatpush1.bf16.msra.mxu0 0
          %413 = vmatprep.subr.bf16.mxu0 0
          %414 = vmatpush1.bf16.msra.mxu0 0
          %415 = vmatprep.subr.bf16.mxu0 0
          %416 = vmatpush1.bf16.msra.mxu0 0
          %417 = vmatprep.subr.bf16.mxu0 0
          %418 = vmatpush1.bf16.msra.mxu0 0
          %419 = vmatprep.subr.bf16.mxu0 0
          %420 = vmatpush1.bf16.msra.mxu0 0
          %421 = vmatprep.subr.bf16.mxu0 0
          %422 = vmatpush1.bf16.msra.mxu0 0
          %423 = vmatprep.subr.bf16.mxu0 0
          %424 = vmatpush1.bf16.msra.mxu0 0
          %425 = vmatprep.subr.bf16.mxu0 0
          %426 = vmatpush1.bf16.msra.mxu0 0
          %427 = vmatprep.subr.bf16.mxu0 0
          %428 = vmatpush1.bf16.msra.mxu0 0
          %429 = vmatprep.subr.bf16.mxu0 0
          %430 = vmatpush1.bf16.msra.mxu0 0
          %431 = vmatprep.subr.bf16.mxu0 0
          %432 = vmatpush1.bf16.msra.mxu0 0
          %433 = vmatprep.subr.bf16.mxu0 0
          %434 = vmatpush1.bf16.msra.mxu0 0
          %435 = vmatprep.subr.bf16.mxu0 0
          %436 = vmatpush1.bf16.msra.mxu0 0
          %437 = vmatprep.subr.bf16.mxu0 0
          %438 = vmatpush1.bf16.msra.mxu0 0
          %439 = vmatprep.subr.bf16.mxu0 0
          %440 = vmatpush1.bf16.msra.mxu0 0
          %441 = vmatprep.mubr.bf16.mxu0 0
          %442 = vmatmul.mubr.bf16.gmra.mrb[0].mxu0 %v400
          %v443 = vpop.f32.mrb[0].mxu0
          %v444 = vadd.f32 %v387, %v443
          %v445 = vpop.f32.mrb[0].mxu0
          %v446 = vpop.f32.mrb[0].mxu0
          %v447 = vadd.f32 %v387, %v446
          %v448 = vpop.f32.mrb[0].mxu0
          %449 = vmatprep.mubr.bf16.mxu0 0
          %450 = vmatmul.mubr.bf16.gmra.mrb[0].mxu0 %v403
          %v451 = vpop.f32.mrb[0].mxu0
          %v452 = vadd.f32 %v387, %v451
          %v453 = vpop.f32.mrb[0].mxu0
          %v454 = vpop.f32.mrb[0].mxu0
          %v455 = vadd.f32 %v387, %v454
          %v456 = vpop.f32.mrb[0].mxu0
          %457 = vdwg.mxu0
          %s458 = smul.u32 %s377, 32
          %s459 = scalar_lea.vmem %s234, %s458 [#allocation6]
          %vm460 = vcmask 261120
          %461 = vst.msk [vmem:[%s459] sm:$0xff] %vm460, %v444
          %462 = vst.msk [vmem:[%s459 + $0x8] sm:$0xff] %vm460, %v447
          %463 = vst.msk [vmem:[%s459 + $0x10] sm:$0xff] %vm460, %v452
          %464 = vst.msk [vmem:[%s459 + $0x18] sm:$0xff] %vm460, %v455
        $region49: #{deconv_block_forward.3} parent=35 // loop_footer
          %s381 = sadd.s32 1, %s377
        $region50: #{deconv_block_forward.3} parent=35 // loop_footer_branch
          %376 = sbr.rel target = $region46
        $region51: #{deconv_block_forward.3} parent=35 // loop_exit
          _
        %s465 = sand.u32 %s135, 1
        %s466 = scalar_lea.sflag [#allocation4], %s465
        %s467 = sand.u32 %s135, 1
        %s468 = smul.addr %s467, 256
        %s469 = scalar_lea.vmem [#allocation6], %s468
        // Predicated region
        $region52: #{deconv_block_forward.3} parent=35 // pred_check
          %p470 = pneg %p145
        $region53: #{deconv_block_forward.3} parent=35 // pred_check_branch
          %472 = sbr.rel (%p470) target = $region55
        $region54: #{deconv_block_forward.3} parent=35 // pred_region
          %s473 = smul.u32 4, %s24
          %s475 = ssub.s32 4096, 4096
          %476 = vsyncadd %s466, %s475
          %s477 = smul.addr %s23, 32
          %s478 = sadd.s32 %s473, %s477
          %s479 = smul.addr %s478, 128
          %s480 = scalar_lea.hbm %s4, %s479
          %s481 = sshll.u32 %s469, 4
          %s482 = int_to_ptr.vmem [resolvable:$true] %s481
          %487 = dma.vmem_to_hbm [thread:$0]  %s482, 4096, %s480, %s466, 128, 128, 8
        $region55: #{deconv_block_forward.3} parent=35 // pred_fallthru
          _
      $region36: #{deconv_block_forward.3} parent=5 // pred_fallthru
        _
      %p488 = scmp.le.s32.totalorder 2, %s14
      // Predicated region
      $region56: #{deconv_block_forward.3} parent=5 // pred_check
        %p489 = pneg %p488
      $region57: #{deconv_block_forward.3} parent=5 // pred_check_branch
        %491 = sbr.rel (%p489) target = $region59
      $region58: #{deconv_block_forward.3} parent=5 // pred_region
        %s492 = ssub.s32 %s14, 2
        // Predicated region
        $region60: #{deconv_block_forward.3} parent=58 // pred_check
          %p493 = pneg %p151
        $region61: #{deconv_block_forward.3} parent=58 // pred_check_branch
          %495 = sbr.rel (%p493) target = $region63
        $region62: #{deconv_block_forward.3} parent=58 // pred_region
          %s496 = sand.u32 %s136, 1
          %s497 = scalar_lea.sflag [#allocation4], %s496
          %s498 = sand.u32 %s136, 1
          %s499 = smul.addr %s498, 256
          %s500 = scalar_lea.vmem [#allocation6], %s499
          %501 = dma.done %s497, 4096
        $region63: #{deconv_block_forward.3} parent=58 // pred_fallthru
          _
      $region59: #{deconv_block_forward.3} parent=5 // pred_fallthru
        _
    $region6: #{deconv_block_forward.3} parent=1 // loop_footer
      %s18 = sadd.s32 1, %s14
    $region7: #{deconv_block_forward.3} parent=1 // loop_footer_branch
      %13 = sbr.rel target = $region3
    $region8: #{deconv_block_forward.3} parent=1 // loop_exit
      _
    %502 = vsyncpa [#allocation4], 1
    %s503 = scalar_lea.sflag [#allocation4], 1
    %504 = vsyncpa %s503, 1
    %505 = vsyncpa [#allocation5], 1
    %s506 = scalar_lea.sflag [#allocation5], 1
    %507 = vsyncpa %s506, 1

</llo_original>
